<compile_context>
chip_gen: v7x
topology: tpu7x:2x2x1
jax: 0.10.0
libtpu: 0.0.40
codegen_flags: <defaults>
</compile_context>

<pallas_src>
import functools

import jax
import jax.numpy as jnp
from jax.experimental import pallas as pl
from jax.experimental.pallas import tpu as pltpu

HIDDEN = 100
LANE = 128  # vreg lane width / f32 MXU-friendly alignment


def mlp_kernel(x_ref, w1_ref, b1_ref, w2_ref, b2_ref, w3_ref, b3_ref, o_ref):
    # Layer 1: Linear(d_in -> 128-padded hidden) + ReLU.  w1 keeps K = d_in
    # (unpadded) so the x tile is consumed at its true feature width.
    h1 = jnp.dot(x_ref[...], w1_ref[...], preferred_element_type=jnp.float32)
    h1 = jnp.maximum(h1 + b1_ref[...], 0.0)          # b1 (1,128) broadcasts over rows

    # Layer 2: Linear(128 -> 128) + ReLU (hidden zero-padding stays exactly 0).
    h2 = jnp.dot(h1, w2_ref[...], preferred_element_type=jnp.float32)
    h2 = jnp.maximum(h2 + b2_ref[...], 0.0)

    # Layer 3: Linear(128 -> padded output), no activation (logits).
    logits = jnp.dot(h2, w3_ref[...], preferred_element_type=jnp.float32)
    o_ref[...] = (logits + b3_ref[...]).astype(o_ref.dtype)


def _round_up(n, m):
    return pl.cdiv(n, m) * m


def _pad_to(a, shape):
    return jnp.pad(a, [(0, t - s) for s, t in zip(a.shape, shape)])


def pad_params(params):
    """Zero-pad hidden/output matmul dims to multiples of 128 (one-time setup).

    w1's contracting (input-feature) dim is intentionally left unpadded so the
    kernel can read x at its true feature width (no HBM input padding).
    """
    d_in = params["w1"].shape[0]
    d_out = params["w3"].shape[1]
    h_p = _round_up(HIDDEN, LANE)
    d_out_p = _round_up(d_out, LANE)
    # TODO(synk): optionally store weights (and cast x tiles) as bf16 with f32
    # accumulation to halve weight HBM/VMEM bytes; kept f32 here so the 1e-4
    # reference check stays tight.
    return {
        "w1": _pad_to(params["w1"], (d_in, h_p)),
        "b1": _pad_to(params["b1"], (1, h_p)),
        "w2": _pad_to(params["w2"], (h_p, h_p)),
        "b2": _pad_to(params["b2"], (1, h_p)),
        "w3": _pad_to(params["w3"], (h_p, d_out_p)),
        "b3": _pad_to(params["b3"], (1, d_out_p)),
    }


@functools.partial(jax.jit, static_argnames=("out_dim", "batch_tile"))
def neural_network_forward(x, padded_params, out_dim, batch_tile=512):
    """Forward pass. x: (B, inputNum+1) f32; padded_params from pad_params()."""
    w1, b1 = padded_params["w1"], padded_params["b1"]
    w2, b2 = padded_params["w2"], padded_params["b2"]
    w3, b3 = padded_params["w3"], padded_params["b3"]

    B, d_in = x.shape
    h_p = w2.shape[0]
    d_out_p = w3.shape[1]

    # --- Batch tiling (all static Python under jit) -------------------------
    b8 = _round_up(B, 8)                      # f32 sublane minimum
    tb = min(batch_tile, b8)
    n_steps = pl.cdiv(b8, tb)
    if n_steps < 2 and B > 128:
        n_steps = 2                           # keep v7x's second TensorCore busy
    tb = _round_up(pl.cdiv(b8, n_steps), 8)   # rebalance -> minimal padded rows
    b_p = n_steps * tb
    if b_p != B:                              # pad batch rows only; features untouched
        x = jnp.pad(x, ((0, b_p - B), (0, 0)))

    # Weights/biases: same block every grid step -> DMA'd once, VMEM-resident.
    resident = lambda a: pl.BlockSpec(a.shape, lambda i: (0, 0))

    # Cost estimate uses the real (unpadded-feature) IO.
    flops = 2 * b_p * (d_in * h_p + h_p * h_p + h_p * d_out_p)
    bytes_accessed = 4 * (
        b_p * d_in + w1.size + b1.size + w2.size + b2.size + w3.size + b3.size
        + b_p * d_out_p
    )

    # Raise scoped-VMEM limit only if a big batch tile would exceed v5e's 16 MiB
    # default (double-buffered x/out tiles + resident weights).
    vmem_bytes = 4 * (w1.size + b1.size + w2.size + b2.size + w3.size + b3.size
                      + 2 * tb * (d_in + d_out_p))
    vmem_limit = None
    if 2 * vmem_bytes > (14 << 20):
        vmem_limit = int(min(_round_up(2 * vmem_bytes, 1 << 20), 64 << 20))

    out_p = pl.pallas_call(
        mlp_kernel,
        out_shape=jax.ShapeDtypeStruct((b_p, d_out_p), jnp.float32),
        grid=(n_steps,),
        in_specs=[
            pl.BlockSpec((tb, d_in), lambda i: (i, 0)),   # x: batch-tiled, true width
            resident(w1), resident(b1),
            resident(w2), resident(b2),
            resident(w3), resident(b3),
        ],
        out_specs=pl.BlockSpec((tb, d_out_p), lambda i: (i, 0)),  # lane-dense stores
        compiler_params=pltpu.CompilerParams(
            dimension_semantics=("parallel",),   # megacore sharding on v7x
            vmem_limit_bytes=vmem_limit,
        ),
        cost_estimate=pl.CostEstimate(
            flops=flops, transcendentals=0, bytes_accessed=bytes_accessed),
    )(x, w1, b1, w2, b2, w3, b3)

    # Strip batch-row / output-lane padding (small slice, fused by XLA).
    return out_p[:B, :out_dim]


def init_params(key, input_num, output_num):
    """Deterministic init mimicking PyTorch nn.Linear default U[-1/sqrt(fan_in), +1/sqrt(fan_in)]."""
    d_in = input_num + 1
    keys = jax.random.split(key, 6)

    def linear(kw, kb, fan_in, fan_out):
        bound = 1.0 / jnp.sqrt(jnp.float32(fan_in))
        w = jax.random.uniform(kw, (fan_in, fan_out), jnp.float32, -bound, bound)
        b = jax.random.uniform(kb, (1, fan_out), jnp.float32, -bound, bound)
        return w, b

    w1, b1 = linear(keys[0], keys[1], d_in, HIDDEN)
    w2, b2 = linear(keys[2], keys[3], HIDDEN, HIDDEN)
    w3, b3 = linear(keys[4], keys[5], HIDDEN, output_num)
    return {"w1": w1, "b1": b1, "w2": w2, "b2": b2, "w3": w3, "b3": b3}


def reference_forward(x, params):
    h1 = jnp.maximum(x @ params["w1"] + params["b1"], 0.0)
    h2 = jnp.maximum(h1 @ params["w2"] + params["b2"], 0.0)
    return h2 @ params["w3"] + params["b3"]


if __name__ == "__main__":
    # NeuralNetwork(inputNum=8, outputNum=4); forward input is (batch, inputNum + 1)
    input_num = 8
    output_num = 4
    batch = 2

    key = jax.random.PRNGKey(0)
    kx, kp = jax.random.split(key)
    x = jax.random.normal(kx, (batch, input_num + 1), jnp.float32)
    params = init_params(kp, input_num, output_num)
    padded_params = pad_params(params)   # one-time lane-aligned param setup

    out = neural_network_forward(x, padded_params, output_num)
    out = jax.block_until_ready(out)

    ref = reference_forward(x, params)
    assert out.shape == (batch, output_num)
    assert jnp.allclose(out, ref, atol=1e-4, rtol=1e-4)

    print("KERNEL_OK")
</pallas_src>

<mosaic_0001>
module attributes {stable_mosaic.version = 11 : i64} {
  func.func @mlp_kernel(%arg0: i32, %arg1: memref<8x9xf32, #tpu.memory_space<vmem>>, %arg2: memref<9x128xf32, #tpu.memory_space<vmem>>, %arg3: memref<1x128xf32, #tpu.memory_space<vmem>>, %arg4: memref<128x128xf32, #tpu.memory_space<vmem>>, %arg5: memref<1x128xf32, #tpu.memory_space<vmem>>, %arg6: memref<128x128xf32, #tpu.memory_space<vmem>>, %arg7: memref<1x128xf32, #tpu.memory_space<vmem>>, %arg8: memref<8x128xf32, #tpu.memory_space<vmem>>) attributes {dimension_semantics = [#tpu.dimension_semantics<parallel>], iteration_bounds = array<i64: 1>, scalar_prefetch = 0 : i64, scratch_operands = 0 : i64, tpu.core_type = #tpu.core_type<tc>, window_params = [{transform_indices = @transform_0, window_bounds = array<i64: 8, 9>}, {pipeline_mode = #tpu.pipeline_mode<synchronous>, transform_indices = @transform_1, window_bounds = array<i64: 9, 128>}, {pipeline_mode = #tpu.pipeline_mode<synchronous>, transform_indices = @transform_2, window_bounds = array<i64: 1, 128>}, {pipeline_mode = #tpu.pipeline_mode<synchronous>, transform_indices = @transform_3, window_bounds = array<i64: 128, 128>}, {pipeline_mode = #tpu.pipeline_mode<synchronous>, transform_indices = @transform_4, window_bounds = array<i64: 1, 128>}, {pipeline_mode = #tpu.pipeline_mode<synchronous>, transform_indices = @transform_5, window_bounds = array<i64: 128, 128>}, {pipeline_mode = #tpu.pipeline_mode<synchronous>, transform_indices = @transform_6, window_bounds = array<i64: 1, 128>}, {transform_indices = @transform_7, window_bounds = array<i64: 8, 128>}]} {
    %c0 = arith.constant 0 : index
    %c0_0 = arith.constant 0 : index
    %0 = vector.load %arg1[%c0, %c0_0] : memref<8x9xf32, #tpu.memory_space<vmem>>, vector<8x9xf32>
    %c0_1 = arith.constant 0 : index
    %c0_2 = arith.constant 0 : index
    %1 = vector.load %arg2[%c0_1, %c0_2] : memref<9x128xf32, #tpu.memory_space<vmem>>, vector<9x128xf32>
    %cst = arith.constant dense<0.000000e+00> : vector<8x128xf32>
    %2 = tpu.matmul %0, %1, %cst {dimension_numbers = #tpu.dot_dimension_numbers<[1], [0], [0], [1], [0, 0, 1, 1], [], []>} : vector<8x9xf32>, vector<9x128xf32>, vector<8x128xf32> -> vector<8x128xf32>
    %c0_3 = arith.constant 0 : index
    %c0_4 = arith.constant 0 : index
    %3 = vector.load %arg3[%c0_3, %c0_4] : memref<1x128xf32, #tpu.memory_space<vmem>>, vector<1x128xf32>
    %4 = vector.broadcast %3 : vector<1x128xf32> to vector<8x128xf32>
    %5 = arith.addf %2, %4 : vector<8x128xf32>
    %cst_5 = arith.constant 0.000000e+00 : f32
    %6 = vector.broadcast %cst_5 : f32 to vector<8x128xf32>
    %7 = arith.maximumf %5, %6 : vector<8x128xf32>
    %c0_6 = arith.constant 0 : index
    %c0_7 = arith.constant 0 : index
    %8 = vector.load %arg4[%c0_6, %c0_7] : memref<128x128xf32, #tpu.memory_space<vmem>>, vector<128x128xf32>
    %cst_8 = arith.constant dense<0.000000e+00> : vector<8x128xf32>
    %9 = tpu.matmul %7, %8, %cst_8 {dimension_numbers = #tpu.dot_dimension_numbers<[1], [0], [0], [1], [0, 0, 1, 1], [], []>} : vector<8x128xf32>, vector<128x128xf32>, vector<8x128xf32> -> vector<8x128xf32>
    %c0_9 = arith.constant 0 : index
    %c0_10 = arith.constant 0 : index
    %10 = vector.load %arg5[%c0_9, %c0_10] : memref<1x128xf32, #tpu.memory_space<vmem>>, vector<1x128xf32>
    %11 = vector.broadcast %10 : vector<1x128xf32> to vector<8x128xf32>
    %12 = arith.addf %9, %11 : vector<8x128xf32>
    %cst_11 = arith.constant 0.000000e+00 : f32
    %13 = vector.broadcast %cst_11 : f32 to vector<8x128xf32>
    %14 = arith.maximumf %12, %13 : vector<8x128xf32>
    %c0_12 = arith.constant 0 : index
    %c0_13 = arith.constant 0 : index
    %15 = vector.load %arg6[%c0_12, %c0_13] : memref<128x128xf32, #tpu.memory_space<vmem>>, vector<128x128xf32>
    %cst_14 = arith.constant dense<0.000000e+00> : vector<8x128xf32>
    %16 = tpu.matmul %14, %15, %cst_14 {dimension_numbers = #tpu.dot_dimension_numbers<[1], [0], [0], [1], [0, 0, 1, 1], [], []>} : vector<8x128xf32>, vector<128x128xf32>, vector<8x128xf32> -> vector<8x128xf32>
    %c0_15 = arith.constant 0 : index
    %c0_16 = arith.constant 0 : index
    %17 = vector.load %arg7[%c0_15, %c0_16] : memref<1x128xf32, #tpu.memory_space<vmem>>, vector<1x128xf32>
    %18 = vector.broadcast %17 : vector<1x128xf32> to vector<8x128xf32>
    %19 = arith.addf %16, %18 : vector<8x128xf32>
    %c0_17 = arith.constant 0 : index
    %c0_18 = arith.constant 0 : index
    %20 = vector.load %arg8[%c0_17, %c0_18] : memref<8x128xf32, #tpu.memory_space<vmem>>, vector<8x128xf32>
    tpu.vector_store %arg8[%c0_17, %c0_18], %19 {strides = array<i32>} : memref<8x128xf32, #tpu.memory_space<vmem>>, vector<8x128xf32>,
    return
  }
  func.func @transform_0(%arg0: i32) -> (i32, i32) {
    %c0_i32 = arith.constant 0 : i32
    %c0_i32_0 = arith.constant 0 : i32
    return %arg0, %c0_i32 : i32, i32
  }
  func.func @transform_1(%arg0: i32) -> (i32, i32) {
    %c0_i32 = arith.constant 0 : i32
    %c0_i32_0 = arith.constant 0 : i32
    %c0_i32_1 = arith.constant 0 : i32
    return %c0_i32, %c0_i32_0 : i32, i32
  }
  func.func @transform_2(%arg0: i32) -> (i32, i32) {
    %c0_i32 = arith.constant 0 : i32
    %c0_i32_0 = arith.constant 0 : i32
    %c0_i32_1 = arith.constant 0 : i32
    return %c0_i32, %c0_i32_0 : i32, i32
  }
  func.func @transform_3(%arg0: i32) -> (i32, i32) {
    %c0_i32 = arith.constant 0 : i32
    %c0_i32_0 = arith.constant 0 : i32
    %c0_i32_1 = arith.constant 0 : i32
    return %c0_i32, %c0_i32_0 : i32, i32
  }
  func.func @transform_4(%arg0: i32) -> (i32, i32) {
    %c0_i32 = arith.constant 0 : i32
    %c0_i32_0 = arith.constant 0 : i32
    %c0_i32_1 = arith.constant 0 : i32
    return %c0_i32, %c0_i32_0 : i32, i32
  }
  func.func @transform_5(%arg0: i32) -> (i32, i32) {
    %c0_i32 = arith.constant 0 : i32
    %c0_i32_0 = arith.constant 0 : i32
    %c0_i32_1 = arith.constant 0 : i32
    return %c0_i32, %c0_i32_0 : i32, i32
  }
  func.func @transform_6(%arg0: i32) -> (i32, i32) {
    %c0_i32 = arith.constant 0 : i32
    %c0_i32_0 = arith.constant 0 : i32
    %c0_i32_1 = arith.constant 0 : i32
    return %c0_i32, %c0_i32_0 : i32, i32
  }
  func.func @transform_7(%arg0: i32) -> (i32, i32) {
    %c0_i32 = arith.constant 0 : i32
    %c0_i32_0 = arith.constant 0 : i32
    return %arg0, %c0_i32 : i32, i32
  }
}

</mosaic_0001>

<llo_original>
// kernel: neural_network_forward.1
$region0: #{neural_network_forward.1}
  #allocation0 [shape = 'u32[]', space=smem, size = 0x4, offset = 0x4, fixed_abs, tag = 'smem constant byte address 0x4 - core index']
  #allocation1 [shape = 'u32[144,128]{1,0:T(1,128)}', space=vmem, size = 0x12000, scoped, tag = 'internal scratch']
  %s0 = inlined_call_operand.vmem [shape: f32[8,9], index: 0, kind: input, shape index: {}]
  %s1 = inlined_call_operand.vmem [shape: f32[9,128], index: 1, kind: input, shape index: {}]
  %s2 = inlined_call_operand.vmem [shape: f32[1,128], index: 2, kind: input, shape index: {}]
  %s3 = inlined_call_operand.hbm [shape: f32[128,128], index: 3, kind: input, shape index: {}]
  %s4 = inlined_call_operand.vmem [shape: f32[1,128], index: 4, kind: input, shape index: {}]
  %s5 = inlined_call_operand.hbm [shape: f32[128,128], index: 5, kind: input, shape index: {}]
  %s6 = inlined_call_operand.vmem [shape: f32[1,128], index: 6, kind: input, shape index: {}]
  %s7 = inlined_call_operand.vmem [shape: f32[8,128], index: 7, kind: output, shape index: {}]
  %s8 = sld [smem:[#allocation0]]
  $region46: #{neural_network_forward.1} parent=0
    _
  %s10 = ssub.s32 1, %s8
  %s11 = scalar_select 0, %s10, %s8
  $region1: #{neural_network_forward.1} parent=0
    #allocation2 [shape = 'u8[65536]{0}', space=vmem, size = 0x10000, scoped, tag = 'input window, operand 3, single buffered']
    #allocation3 [shape = 's32[1]{0}', space=sflag, size = 0x4, scoped, tag = 'scoped memory for neural_network_forward.1']
    #allocation4 [shape = 'u8[65536]{0}', space=vmem, size = 0x10000, scoped, tag = 'input window, operand 5, single buffered']
    #allocation5 [shape = 's32[1]{0}', space=sflag, size = 0x4, scoped, tag = 'scoped memory for neural_network_forward.1']
    %12 = vsyncpa [#allocation3], 0
    %13 = vsyncpa [#allocation5], 0
    // Predicated region
    $region2: #{neural_network_forward.1} parent=1 // pred_check
      _
    $region3: #{neural_network_forward.1} parent=1 // pred_check_branch
      %15 = sbr.rel (0) target = $region5
    $region4: #{neural_network_forward.1} parent=1 // pred_region
      _
    $region5: #{neural_network_forward.1} parent=1 // pred_fallthru
      _
    // Predicated region
    $region6: #{neural_network_forward.1} parent=1 // pred_check
      _
    $region7: #{neural_network_forward.1} parent=1 // pred_check_branch
      %17 = sbr.rel (0) target = $region9
    $region8: #{neural_network_forward.1} parent=1 // pred_region
      _
    $region9: #{neural_network_forward.1} parent=1 // pred_fallthru
      _
    // Predicated region
    $region10: #{neural_network_forward.1} parent=1 // pred_check
      _
    $region11: #{neural_network_forward.1} parent=1 // pred_check_branch
      %19 = sbr.rel (0) target = $region13
    $region12: #{neural_network_forward.1} parent=1 // pred_region
      _
    $region13: #{neural_network_forward.1} parent=1 // pred_fallthru
      _
    // Predicated region
    $region14: #{neural_network_forward.1} parent=1 // pred_check
      _
    $region15: #{neural_network_forward.1} parent=1 // pred_check_branch
      %21 = sbr.rel (0) target = $region17
    $region16: #{neural_network_forward.1} parent=1 // pred_region
      %s23 = ssub.s32 2048, 2048
      %24 = vsyncadd [#allocation3], %s23
      %s25 = sshll.u32 [#allocation2], 4
      %s26 = int_to_ptr.vmem [resolvable:$true] %s25
      %31 = dma.hbm_to_vmem [thread:$0]  %s3, 2048, %s26, [#allocation3], 128, 128, 8
    $region17: #{neural_network_forward.1} parent=1 // pred_fallthru
      _
    // Predicated region
    $region18: #{neural_network_forward.1} parent=1 // pred_check
      _
    $region19: #{neural_network_forward.1} parent=1 // pred_check_branch
      %33 = sbr.rel (0) target = $region21
    $region20: #{neural_network_forward.1} parent=1 // pred_region
      _
    $region21: #{neural_network_forward.1} parent=1 // pred_fallthru
      _
    // Predicated region
    $region22: #{neural_network_forward.1} parent=1 // pred_check
      _
    $region23: #{neural_network_forward.1} parent=1 // pred_check_branch
      %35 = sbr.rel (0) target = $region25
    $region24: #{neural_network_forward.1} parent=1 // pred_region
      %s37 = ssub.s32 2048, 2048
      %38 = vsyncadd [#allocation5], %s37
      %s39 = sshll.u32 [#allocation4], 4
      %s40 = int_to_ptr.vmem [resolvable:$true] %s39
      %45 = dma.hbm_to_vmem [thread:$0]  %s5, 2048, %s40, [#allocation5], 128, 128, 8
    $region25: #{neural_network_forward.1} parent=1 // pred_fallthru
      _
    // Predicated region
    $region26: #{neural_network_forward.1} parent=1 // pred_check
      _
    $region27: #{neural_network_forward.1} parent=1 // pred_check_branch
      %47 = sbr.rel (0) target = $region29
    $region28: #{neural_network_forward.1} parent=1 // pred_region
      _
    $region29: #{neural_network_forward.1} parent=1 // pred_fallthru
      _
    // Predicated region
    $region30: #{neural_network_forward.1} parent=1 // pred_check
      _
    $region31: #{neural_network_forward.1} parent=1 // pred_check_branch
      %49 = sbr.rel (0) target = $region33
    $region32: #{neural_network_forward.1} parent=1 // pred_region
      %50 = dma.done [#allocation3], 2048
    $region33: #{neural_network_forward.1} parent=1 // pred_fallthru
      _
    // Predicated region
    $region34: #{neural_network_forward.1} parent=1 // pred_check
      _
    $region35: #{neural_network_forward.1} parent=1 // pred_check_branch
      %52 = sbr.rel (0) target = $region37
    $region36: #{neural_network_forward.1} parent=1 // pred_region
      %53 = dma.done [#allocation5], 2048
    $region37: #{neural_network_forward.1} parent=1 // pred_fallthru
      _
    %v54 = vld [vmem:[%s0] sm:$0xff]
    %v55 = vld [vmem:[%s1] sm:$0xff]
    %v56 = vld [vmem:[%s1 + $0x8] sm:$0x1]
    %v57 = vld [vmem:[%s2] sm:$0x1]
    %v59 = vlaneseq
    %v60 = vshrl.u32 %v59, 7
    %v61 = vsub.s32 0, %v60
    %v62 = vrot.slane %v57, %v61
    %vm64 = vcmask 72704
    %v66 = vsel %vm64, %v54, 0
    %vm68 = vcmask 1040384
    %v70 = vsel %vm68, %v56, 0
    %72 = vmatprep.subr.mxu0 0.0
    %73 = vmatpush1.msra.mxu0 %v55
    %74 = vmatprep.subr.mxu0 0.0
    %75 = vmatpush1.msra.mxu0 %v70
    %76 = vmatprep.subr.mxu0 0.0
    %77 = vmatpush1.msra.mxu0 0.0
    %78 = vmatprep.subr.mxu0 0.0
    %79 = vmatpush1.msra.mxu0 0.0
    %80 = vmatprep.subr.mxu0 0.0
    %81 = vmatpush1.msra.mxu0 0.0
    %82 = vmatprep.subr.mxu0 0.0
    %83 = vmatpush1.msra.mxu0 0.0
    %84 = vmatprep.subr.mxu0 0.0
    %85 = vmatpush1.msra.mxu0 0.0
    %86 = vmatprep.subr.mxu0 0.0
    %87 = vmatpush1.msra.mxu0 0.0
    %88 = vmatprep.subr.mxu0 0.0
    %89 = vmatpush1.msra.mxu0 0.0
    %90 = vmatprep.subr.mxu0 0.0
    %91 = vmatpush1.msra.mxu0 0.0
    %92 = vmatprep.subr.mxu0 0.0
    %93 = vmatpush1.msra.mxu0 0.0
    %94 = vmatprep.subr.mxu0 0.0
    %95 = vmatpush1.msra.mxu0 0.0
    %96 = vmatprep.subr.mxu0 0.0
    %97 = vmatpush1.msra.mxu0 0.0
    %98 = vmatprep.subr.mxu0 0.0
    %99 = vmatpush1.msra.mxu0 0.0
    %100 = vmatprep.subr.mxu0 0.0
    %101 = vmatpush1.msra.mxu0 0.0
    %102 = vmatprep.subr.mxu0 0.0
    %103 = vmatpush1.msra.mxu0 0.0
    %104 = vmatprep.subr.mxu0 0.0
    %105 = vmatpush1.msra.mxu0 0.0
    %106 = vmatprep.subr.mxu0 0.0
    %107 = vmatpush1.msra.mxu0 0.0
    %108 = vmatprep.subr.mxu0 0.0
    %109 = vmatpush1.msra.mxu0 0.0
    %110 = vmatprep.subr.mxu0 0.0
    %111 = vmatpush1.msra.mxu0 0.0
    %112 = vmatprep.subr.mxu0 0.0
    %113 = vmatpush1.msra.mxu0 0.0
    %114 = vmatprep.subr.mxu0 0.0
    %115 = vmatpush1.msra.mxu0 0.0
    %116 = vmatprep.subr.mxu0 0.0
    %117 = vmatpush1.msra.mxu0 0.0
    %118 = vmatprep.subr.mxu0 0.0
    %119 = vmatpush1.msra.mxu0 0.0
    %120 = vmatprep.subr.mxu0 0.0
    %121 = vmatpush1.msra.mxu0 0.0
    %122 = vmatprep.subr.mxu0 0.0
    %123 = vmatpush1.msra.mxu0 0.0
    %124 = vmatprep.subr.mxu0 0.0
    %125 = vmatpush1.msra.mxu0 0.0
    %126 = vmatprep.subr.mxu0 0.0
    %127 = vmatpush1.msra.mxu0 0.0
    %128 = vmatprep.subr.mxu0 0.0
    %129 = vmatpush1.msra.mxu0 0.0
    %130 = vmatprep.subr.mxu0 0.0
    %131 = vmatpush1.msra.mxu0 0.0
    %132 = vmatprep.subr.mxu0 0.0
    %133 = vmatpush1.msra.mxu0 0.0
    %134 = vmatprep.subr.mxu0 0.0
    %135 = vmatpush1.msra.mxu0 0.0
    %136 = vmatprep.mubr.f32.mxu0 0.0
    %137 = vmatmul.mubr.f32.gmra.mrb[0].mxu0 %v66
    %v138 = vpop.f32.mrb[0].mxu0
    %v139 = vadd.f32 %v62, %v138
    %v140 = vpop.f32.mrb[0].mxu0
    %141 = vdwg.mxu0
    %v142 = vmax.f32 %v139, 0.0
    %v143 = vld [vmem:[#allocation2] sm:$0xff]
    %v144 = vld [vmem:[#allocation2 + $0x8] sm:$0xff]
    %v145 = vld [vmem:[#allocation2 + $0x10] sm:$0xff]
    %v146 = vld [vmem:[#allocation2 + $0x18] sm:$0xff]
    %v147 = vld [vmem:[#allocation2 + $0x20] sm:$0xff]
    %v148 = vld [vmem:[#allocation2 + $0x28] sm:$0xff]
    %v149 = vld [vmem:[#allocation2 + $0x30] sm:$0xff]
    %v150 = vld [vmem:[#allocation2 + $0x38] sm:$0xff]
    %v151 = vld [vmem:[#allocation2 + $0x40] sm:$0xff]
    %v152 = vld [vmem:[#allocation2 + $0x48] sm:$0xff]
    %v153 = vld [vmem:[#allocation2 + $0x50] sm:$0xff]
    %v154 = vld [vmem:[#allocation2 + $0x58] sm:$0xff]
    %v155 = vld [vmem:[#allocation2 + $0x60] sm:$0xff]
    %v156 = vld [vmem:[#allocation2 + $0x68] sm:$0xff]
    %v157 = vld [vmem:[#allocation2 + $0x70] sm:$0xff]
    %v158 = vld [vmem:[#allocation2 + $0x78] sm:$0xff]
    %v159 = vld [vmem:[%s4] sm:$0x1]
    %v161 = vlaneseq
    %v162 = vshrl.u32 %v161, 7
    %v163 = vsub.s32 0, %v162
    %v164 = vrot.slane %v159, %v163
    %166 = vmatprep.subr.mxu0 0.0
    %167 = vmatpush1.msra.mxu0 %v143
    %168 = vmatprep.subr.mxu0 0.0
    %169 = vmatpush1.msra.mxu0 %v144
    %170 = vmatprep.subr.mxu0 0.0
    %171 = vmatpush1.msra.mxu0 %v145
    %172 = vmatprep.subr.mxu0 0.0
    %173 = vmatpush1.msra.mxu0 %v146
    %174 = vmatprep.subr.mxu0 0.0
    %175 = vmatpush1.msra.mxu0 %v147
    %176 = vmatprep.subr.mxu0 0.0
    %177 = vmatpush1.msra.mxu0 %v148
    %178 = vmatprep.subr.mxu0 0.0
    %179 = vmatpush1.msra.mxu0 %v149
    %180 = vmatprep.subr.mxu0 0.0
    %181 = vmatpush1.msra.mxu0 %v150
    %182 = vmatprep.subr.mxu0 0.0
    %183 = vmatpush1.msra.mxu0 %v151
    %184 = vmatprep.subr.mxu0 0.0
    %185 = vmatpush1.msra.mxu0 %v152
    %186 = vmatprep.subr.mxu0 0.0
    %187 = vmatpush1.msra.mxu0 %v153
    %188 = vmatprep.subr.mxu0 0.0
    %189 = vmatpush1.msra.mxu0 %v154
    %190 = vmatprep.subr.mxu0 0.0
    %191 = vmatpush1.msra.mxu0 %v155
    %192 = vmatprep.subr.mxu0 0.0
    %193 = vmatpush1.msra.mxu0 %v156
    %194 = vmatprep.subr.mxu0 0.0
    %195 = vmatpush1.msra.mxu0 %v157
    %196 = vmatprep.subr.mxu0 0.0
    %197 = vmatpush1.msra.mxu0 %v158
    %198 = vmatprep.subr.mxu0 0.0
    %199 = vmatpush1.msra.mxu0 0.0
    %200 = vmatprep.subr.mxu0 0.0
    %201 = vmatpush1.msra.mxu0 0.0
    %202 = vmatprep.subr.mxu0 0.0
    %203 = vmatpush1.msra.mxu0 0.0
    %204 = vmatprep.subr.mxu0 0.0
    %205 = vmatpush1.msra.mxu0 0.0
    %206 = vmatprep.subr.mxu0 0.0
    %207 = vmatpush1.msra.mxu0 0.0
    %208 = vmatprep.subr.mxu0 0.0
    %209 = vmatpush1.msra.mxu0 0.0
    %210 = vmatprep.subr.mxu0 0.0
    %211 = vmatpush1.msra.mxu0 0.0
    %212 = vmatprep.subr.mxu0 0.0
    %213 = vmatpush1.msra.mxu0 0.0
    %214 = vmatprep.subr.mxu0 0.0
    %215 = vmatpush1.msra.mxu0 0.0
    %216 = vmatprep.subr.mxu0 0.0
    %217 = vmatpush1.msra.mxu0 0.0
    %218 = vmatprep.subr.mxu0 0.0
    %219 = vmatpush1.msra.mxu0 0.0
    %220 = vmatprep.subr.mxu0 0.0
    %221 = vmatpush1.msra.mxu0 0.0
    %222 = vmatprep.subr.mxu0 0.0
    %223 = vmatpush1.msra.mxu0 0.0
    %224 = vmatprep.subr.mxu0 0.0
    %225 = vmatpush1.msra.mxu0 0.0
    %226 = vmatprep.subr.mxu0 0.0
    %227 = vmatpush1.msra.mxu0 0.0
    %228 = vmatprep.subr.mxu0 0.0
    %229 = vmatpush1.msra.mxu0 0.0
    %230 = vmatprep.mubr.f32.mxu0 0.0
    %231 = vmatmul.mubr.f32.gmra.mrb[0].mxu0 %v142
    %v232 = vpop.f32.mrb[0].mxu0
    %v233 = vadd.f32 %v164, %v232
    %v234 = vpop.f32.mrb[0].mxu0
    %235 = vdwg.mxu0
    %v236 = vmax.f32 %v233, 0.0
    %v237 = vld [vmem:[#allocation4] sm:$0xff]
    %v238 = vld [vmem:[#allocation4 + $0x8] sm:$0xff]
    %v239 = vld [vmem:[#allocation4 + $0x10] sm:$0xff]
    %v240 = vld [vmem:[#allocation4 + $0x18] sm:$0xff]
    %v241 = vld [vmem:[#allocation4 + $0x20] sm:$0xff]
    %v242 = vld [vmem:[#allocation4 + $0x28] sm:$0xff]
    %v243 = vld [vmem:[#allocation4 + $0x30] sm:$0xff]
    %v244 = vld [vmem:[#allocation4 + $0x38] sm:$0xff]
    %v245 = vld [vmem:[#allocation4 + $0x40] sm:$0xff]
    %v246 = vld [vmem:[#allocation4 + $0x48] sm:$0xff]
    %v247 = vld [vmem:[#allocation4 + $0x50] sm:$0xff]
    %v248 = vld [vmem:[#allocation4 + $0x58] sm:$0xff]
    %v249 = vld [vmem:[#allocation4 + $0x60] sm:$0xff]
    %v250 = vld [vmem:[#allocation4 + $0x68] sm:$0xff]
    %v251 = vld [vmem:[#allocation4 + $0x70] sm:$0xff]
    %v252 = vld [vmem:[#allocation4 + $0x78] sm:$0xff]
    %v253 = vld [vmem:[%s6] sm:$0x1]
    %v255 = vlaneseq
    %v256 = vshrl.u32 %v255, 7
    %v257 = vsub.s32 0, %v256
    %v258 = vrot.slane %v253, %v257
    %260 = vmatprep.subr.mxu0 0.0
    %261 = vmatpush1.msra.mxu0 %v237
    %262 = vmatprep.subr.mxu0 0.0
    %263 = vmatpush1.msra.mxu0 %v238
    %264 = vmatprep.subr.mxu0 0.0
    %265 = vmatpush1.msra.mxu0 %v239
    %266 = vmatprep.subr.mxu0 0.0
    %267 = vmatpush1.msra.mxu0 %v240
    %268 = vmatprep.subr.mxu0 0.0
    %269 = vmatpush1.msra.mxu0 %v241
    %270 = vmatprep.subr.mxu0 0.0
    %271 = vmatpush1.msra.mxu0 %v242
    %272 = vmatprep.subr.mxu0 0.0
    %273 = vmatpush1.msra.mxu0 %v243
    %274 = vmatprep.subr.mxu0 0.0
    %275 = vmatpush1.msra.mxu0 %v244
    %276 = vmatprep.subr.mxu0 0.0
    %277 = vmatpush1.msra.mxu0 %v245
    %278 = vmatprep.subr.mxu0 0.0
    %279 = vmatpush1.msra.mxu0 %v246
    %280 = vmatprep.subr.mxu0 0.0
    %281 = vmatpush1.msra.mxu0 %v247
    %282 = vmatprep.subr.mxu0 0.0
    %283 = vmatpush1.msra.mxu0 %v248
    %284 = vmatprep.subr.mxu0 0.0
    %285 = vmatpush1.msra.mxu0 %v249
    %286 = vmatprep.subr.mxu0 0.0
    %287 = vmatpush1.msra.mxu0 %v250
    %288 = vmatprep.subr.mxu0 0.0
    %289 = vmatpush1.msra.mxu0 %v251
    %290 = vmatprep.subr.mxu0 0.0
    %291 = vmatpush1.msra.mxu0 %v252
    %292 = vmatprep.subr.mxu0 0.0
    %293 = vmatpush1.msra.mxu0 0.0
    %294 = vmatprep.subr.mxu0 0.0
    %295 = vmatpush1.msra.mxu0 0.0
    %296 = vmatprep.subr.mxu0 0.0
    %297 = vmatpush1.msra.mxu0 0.0
    %298 = vmatprep.subr.mxu0 0.0
    %299 = vmatpush1.msra.mxu0 0.0
    %300 = vmatprep.subr.mxu0 0.0
    %301 = vmatpush1.msra.mxu0 0.0
    %302 = vmatprep.subr.mxu0 0.0
    %303 = vmatpush1.msra.mxu0 0.0
    %304 = vmatprep.subr.mxu0 0.0
    %305 = vmatpush1.msra.mxu0 0.0
    %306 = vmatprep.subr.mxu0 0.0
    %307 = vmatpush1.msra.mxu0 0.0
    %308 = vmatprep.subr.mxu0 0.0
    %309 = vmatpush1.msra.mxu0 0.0
    %310 = vmatprep.subr.mxu0 0.0
    %311 = vmatpush1.msra.mxu0 0.0
    %312 = vmatprep.subr.mxu0 0.0
    %313 = vmatpush1.msra.mxu0 0.0
    %314 = vmatprep.subr.mxu0 0.0
    %315 = vmatpush1.msra.mxu0 0.0
    %316 = vmatprep.subr.mxu0 0.0
    %317 = vmatpush1.msra.mxu0 0.0
    %318 = vmatprep.subr.mxu0 0.0
    %319 = vmatpush1.msra.mxu0 0.0
    %320 = vmatprep.subr.mxu0 0.0
    %321 = vmatpush1.msra.mxu0 0.0
    %322 = vmatprep.subr.mxu0 0.0
    %323 = vmatpush1.msra.mxu0 0.0
    %324 = vmatprep.mubr.f32.mxu0 0.0
    %325 = vmatmul.mubr.f32.gmra.mrb[0].mxu0 %v236
    %v326 = vpop.f32.mrb[0].mxu0
    %v327 = vadd.f32 %v258, %v326
    %v328 = vpop.f32.mrb[0].mxu0
    %329 = vdwg.mxu0
    %330 = vst [vmem:[%s7] sm:$0xff] %v327
    // Predicated region
    $region38: #{neural_network_forward.1} parent=1 // pred_check
      _
    $region39: #{neural_network_forward.1} parent=1 // pred_check_branch
      %332 = sbr.rel (0) target = $region41
    $region40: #{neural_network_forward.1} parent=1 // pred_region
      _
    $region41: #{neural_network_forward.1} parent=1 // pred_fallthru
      _
    // Predicated region
    $region42: #{neural_network_forward.1} parent=1 // pred_check
      _
    $region43: #{neural_network_forward.1} parent=1 // pred_check_branch
      %334 = sbr.rel (0) target = $region45
    $region44: #{neural_network_forward.1} parent=1 // pred_region
      _
    $region45: #{neural_network_forward.1} parent=1 // pred_fallthru
      _
    %335 = vsyncpa [#allocation3], 1
    %336 = vsyncpa [#allocation5], 1

</llo_original>
